<compile_context>
chip_gen: v7x
topology: tpu7x:2x2x1
jax: 0.10.0
libtpu: 0.0.40
codegen_flags: <defaults>
</compile_context>

<pallas_src>
import functools

import jax
import jax.numpy as jnp
from jax.experimental import pallas as pl
from jax.experimental.pallas import tpu as pltpu

H1, H2 = 64, 128  # hidden sizes fixed by the PyTorch module


# --------------------------------------------------------------------------
# kernel
# --------------------------------------------------------------------------
def mlp_kernel(x_ref, w1_ref, b1_ref, w2_ref, b2_ref, w3_ref, b3_ref, o_ref,
               *, act_dtype):
    mm = w1_ref.dtype
    # VPU cast f32 -> bf16 inside the kernel; hides completely under MXU pushes.
    x = x_ref[...].astype(mm)

    # hidden1: Linear(input_size, 64) + sigmoid via tanh identity
    #          (1 EUP push per element instead of exp + reciprocal)
    z1 = jnp.dot(x, w1_ref[...], preferred_element_type=jnp.float32) + b1_ref[...]
    z1 = z1.astype(act_dtype)                       # bf16 acts on v6e/v7x, f32 on v5e
    h1 = (0.5 * (jnp.tanh(0.5 * z1) + 1.0)).astype(mm)

    # hidden2: Linear(64, 128) + tanh
    z2 = jnp.dot(h1, w2_ref[...], preferred_element_type=jnp.float32) + b2_ref[...]
    h2 = jnp.tanh(z2.astype(act_dtype)).astype(mm)

    # output: Linear(128, output_size), no activation
    o_ref[...] = (jnp.dot(h2, w3_ref[...], preferred_element_type=jnp.float32)
                  + b3_ref[...]).astype(o_ref.dtype)


# --------------------------------------------------------------------------
# chip-dependent knobs
# --------------------------------------------------------------------------
def _device_kind():
    try:
        return jax.devices()[0].device_kind.lower()
    except Exception:
        return ""


def _activation_dtype(matmul_dtype):
    # v6e/v7x have bf16 VPU+EUP -> packed bf16 tanh halves EUP pushes.
    # v5e (and older) have no bf16 EUP path -> keep f32 activations.
    kind = _device_kind()
    if ("v6" in kind) or ("v7" in kind):
        return matmul_dtype
    return jnp.float32


def _min_grid_steps():
    # v7x has 2 TensorCores per chip: keep >=2 "parallel" grid steps so both
    # cores get work. v5e/v6e have 1 TC -> just maximize the tile.
    return 2 if "v7" in _device_kind() else 1


def _select_tb(B, tb):
    if tb is None:
        tb = 2048
    min_steps = _min_grid_steps()
    if min_steps > 1 and B >= min_steps * 256:
        tb = min(tb, max(256, (B // min_steps) // 256 * 256))
    tb = min(tb, pl.cdiv(B, 8) * 8)                 # never exceed the padded batch
    if tb >= 256:
        tb = (tb // 256) * 256                      # full MXU M chunks
    else:
        tb = max(8, (tb // 8) * 8)                  # sublane rule for tiny batches
    return tb


# --------------------------------------------------------------------------
# wrapper
# --------------------------------------------------------------------------
def prepare_params(params, matmul_dtype=jnp.bfloat16):
    """Cast weights to the MXU dtype ONCE; reuse across forward calls."""
    w1, b1, w2, b2, w3, b3 = params
    return (w1.astype(matmul_dtype), b1.astype(jnp.float32),
            w2.astype(matmul_dtype), b2.astype(jnp.float32),
            w3.astype(matmul_dtype), b3.astype(jnp.float32))


def network_forward(x, prepared_params, *, tb=None):
    """Fused MLP forward. x: [B, input_size] f32 -> [B, output_size] f32."""
    w1, b1, w2, b2, w3, b3 = prepared_params
    B, in_size = x.shape
    out_size = w3.shape[1]

    tb = _select_tb(B, tb)
    Bp = pl.cdiv(B, tb) * tb
    grid = (Bp // tb,)

    # Pad only the ragged tail (zeros -> harmless, sliced off after); x stays f32.
    x_in = x if Bp == B else jnp.pad(x, ((0, Bp - B), (0, 0)))

    act_dtype = _activation_dtype(w1.dtype)

    flops = 2 * Bp * (in_size * H1 + H1 * H2 + H2 * out_size)
    transcendentals = Bp * (H1 + H2)                # one tanh per hidden element
    bytes_accessed = int(
        x_in.size * x_in.dtype.itemsize
        + Bp * out_size * 4
        + sum(a.size * a.dtype.itemsize for a in prepared_params))

    # Per-tile VMEM estimate: double-buffered x/out tiles + f32 intermediates
    # + resident weights.  Only raise the scoped limit if we could trip v5e's
    # 16 MiB default.
    est_vmem = (2 * tb * in_size * x_in.dtype.itemsize
                + 2 * tb * out_size * 4
                + 2 * tb * (H1 + H2) * 4
                + sum(a.size * a.dtype.itemsize for a in prepared_params))
    cp_kwargs = dict(dimension_semantics=("parallel",))
    if est_vmem > 12 * (1 << 20):
        cp_kwargs["vmem_limit_bytes"] = min(2 * est_vmem, 100 << 20)

    kernel = functools.partial(mlp_kernel, act_dtype=act_dtype)

    out = pl.pallas_call(
        kernel,
        out_shape=jax.ShapeDtypeStruct((Bp, out_size), jnp.float32),
        grid=grid,
        in_specs=[
            pl.BlockSpec((tb, in_size), lambda i: (i, 0)),   # x tiled over batch
            pl.BlockSpec(w1.shape, lambda i: (0, 0)),        # weights resident
            pl.BlockSpec(b1.shape, lambda i: (0, 0)),
            pl.BlockSpec(w2.shape, lambda i: (0, 0)),
            pl.BlockSpec(b2.shape, lambda i: (0, 0)),
            pl.BlockSpec(w3.shape, lambda i: (0, 0)),
            pl.BlockSpec(b3.shape, lambda i: (0, 0)),
        ],
        out_specs=pl.BlockSpec((tb, out_size), lambda i: (i, 0)),
        compiler_params=pltpu.CompilerParams(**cp_kwargs),
        cost_estimate=pl.CostEstimate(flops=flops,
                                      transcendentals=transcendentals,
                                      bytes_accessed=bytes_accessed),
    )(x_in, w1, b1, w2, b2, w3, b3)

    return out[:B] if Bp != B else out


# --------------------------------------------------------------------------
# params / reference
# --------------------------------------------------------------------------
def init_params(key, input_size, output_size):
    """Deterministic init mimicking nn.Linear default U(-1/sqrt(fan_in), +)."""
    def linear(k, fan_in, fan_out):
        kw, kb = jax.random.split(k)
        bound = 1.0 / (fan_in ** 0.5)
        w = jax.random.uniform(kw, (fan_in, fan_out), jnp.float32, -bound, bound)
        b = jax.random.uniform(kb, (1, fan_out), jnp.float32, -bound, bound)
        return w, b

    k1, k2, k3 = jax.random.split(key, 3)
    w1, b1 = linear(k1, input_size, H1)
    w2, b2 = linear(k2, H1, H2)
    w3, b3 = linear(k3, H2, output_size)
    return (w1, b1, w2, b2, w3, b3)


def network_ref(x, params):
    """Pure-JAX f32 reference for correctness check."""
    w1, b1, w2, b2, w3, b3 = params
    h1 = jax.nn.sigmoid(x @ w1 + b1)
    h2 = jnp.tanh(h1 @ w2 + b2)
    return h2 @ w3 + b3


# --------------------------------------------------------------------------
# main
# --------------------------------------------------------------------------
if __name__ == "__main__":
    key = jax.random.PRNGKey(0)
    kx, kp, kx2 = jax.random.split(key, 3)

    batch, input_size, output_size = 8, 32, 16
    params = init_params(kp, input_size, output_size)
    prepared = prepare_params(params)               # bf16 weights cached once

    # small case: tb clamps to the (8-aligned) batch, single grid step
    x = jax.random.normal(kx, (batch, input_size), jnp.float32)
    out = jax.block_until_ready(network_forward(x, prepared))
    ref = network_ref(x, params)
    assert out.shape == (batch, output_size)
    # bf16 matmul operands (and bf16 activations on v6e/v7x) -> loose tolerance
    assert jnp.allclose(out, ref, atol=5e-2, rtol=5e-2), "mismatch vs reference (small)"

    # larger, non-tile-divisible batch: exercises 256-multiple tiling,
    # cdiv grid and zero-padded tail
    big_batch = 300
    x2 = jax.random.normal(kx2, (big_batch, input_size), jnp.float32)
    out2 = jax.block_until_ready(network_forward(x2, prepared))
    ref2 = network_ref(x2, params)
    assert out2.shape == (big_batch, output_size)
    assert jnp.allclose(out2, ref2, atol=5e-2, rtol=5e-2), "mismatch vs reference (big)"

    print("KERNEL_OK")
</pallas_src>

<mosaic_0001>
module attributes {stable_mosaic.version = 11 : i64} {
  func.func @mlp_kernel(%arg0: i32, %arg1: memref<8x32xf32, #tpu.memory_space<vmem>>, %arg2: memref<32x64xbf16, #tpu.memory_space<vmem>>, %arg3: memref<1x64xf32, #tpu.memory_space<vmem>>, %arg4: memref<64x128xbf16, #tpu.memory_space<vmem>>, %arg5: memref<1x128xf32, #tpu.memory_space<vmem>>, %arg6: memref<128x16xbf16, #tpu.memory_space<vmem>>, %arg7: memref<1x16xf32, #tpu.memory_space<vmem>>, %arg8: memref<8x16xf32, #tpu.memory_space<vmem>>) attributes {dimension_semantics = [#tpu.dimension_semantics<parallel>], iteration_bounds = array<i64: 1>, scalar_prefetch = 0 : i64, scratch_operands = 0 : i64, tpu.core_type = #tpu.core_type<tc>, window_params = [{transform_indices = @transform_0, window_bounds = array<i64: 8, 32>}, {pipeline_mode = #tpu.pipeline_mode<synchronous>, transform_indices = @transform_1, window_bounds = array<i64: 32, 64>}, {pipeline_mode = #tpu.pipeline_mode<synchronous>, transform_indices = @transform_2, window_bounds = array<i64: 1, 64>}, {pipeline_mode = #tpu.pipeline_mode<synchronous>, transform_indices = @transform_3, window_bounds = array<i64: 64, 128>}, {pipeline_mode = #tpu.pipeline_mode<synchronous>, transform_indices = @transform_4, window_bounds = array<i64: 1, 128>}, {pipeline_mode = #tpu.pipeline_mode<synchronous>, transform_indices = @transform_5, window_bounds = array<i64: 128, 16>}, {pipeline_mode = #tpu.pipeline_mode<synchronous>, transform_indices = @transform_6, window_bounds = array<i64: 1, 16>}, {transform_indices = @transform_7, window_bounds = array<i64: 8, 16>}]} {
    %c0 = arith.constant 0 : index
    %c0_0 = arith.constant 0 : index
    %0 = vector.load %arg1[%c0, %c0_0] : memref<8x32xf32, #tpu.memory_space<vmem>>, vector<8x32xf32>
    %1 = arith.truncf %0 : vector<8x32xf32> to vector<8x32xbf16>
    %c0_1 = arith.constant 0 : index
    %c0_2 = arith.constant 0 : index
    %2 = vector.load %arg2[%c0_1, %c0_2] : memref<32x64xbf16, #tpu.memory_space<vmem>>, vector<32x64xbf16>
    %cst = arith.constant dense<0.000000e+00> : vector<8x64xf32>
    %3 = tpu.matmul %1, %2, %cst {dimension_numbers = #tpu.dot_dimension_numbers<[1], [0], [0], [1], [0, 0, 1, 1], [], []>} : vector<8x32xbf16>, vector<32x64xbf16>, vector<8x64xf32> -> vector<8x64xf32>
    %c0_3 = arith.constant 0 : index
    %c0_4 = arith.constant 0 : index
    %4 = vector.load %arg3[%c0_3, %c0_4] : memref<1x64xf32, #tpu.memory_space<vmem>>, vector<1x64xf32>
    %5 = vector.broadcast %4 : vector<1x64xf32> to vector<8x64xf32>
    %6 = arith.addf %3, %5 : vector<8x64xf32>
    %cst_5 = arith.constant 5.000000e-01 : f32
    %7 = vector.broadcast %cst_5 : f32 to vector<8x64xf32>
    %8 = arith.mulf %7, %6 : vector<8x64xf32>
    %9 = math.tanh %8 : vector<8x64xf32>
    %cst_6 = arith.constant 1.000000e+00 : f32
    %10 = vector.broadcast %cst_6 : f32 to vector<8x64xf32>
    %11 = arith.addf %9, %10 : vector<8x64xf32>
    %cst_7 = arith.constant 5.000000e-01 : f32
    %12 = vector.broadcast %cst_7 : f32 to vector<8x64xf32>
    %13 = arith.mulf %12, %11 : vector<8x64xf32>
    %14 = arith.truncf %13 : vector<8x64xf32> to vector<8x64xbf16>
    %c0_8 = arith.constant 0 : index
    %c0_9 = arith.constant 0 : index
    %15 = vector.load %arg4[%c0_8, %c0_9] : memref<64x128xbf16, #tpu.memory_space<vmem>>, vector<64x128xbf16>
    %cst_10 = arith.constant dense<0.000000e+00> : vector<8x128xf32>
    %16 = tpu.matmul %14, %15, %cst_10 {dimension_numbers = #tpu.dot_dimension_numbers<[1], [0], [0], [1], [0, 0, 1, 1], [], []>} : vector<8x64xbf16>, vector<64x128xbf16>, vector<8x128xf32> -> vector<8x128xf32>
    %c0_11 = arith.constant 0 : index
    %c0_12 = arith.constant 0 : index
    %17 = vector.load %arg5[%c0_11, %c0_12] : memref<1x128xf32, #tpu.memory_space<vmem>>, vector<1x128xf32>
    %18 = vector.broadcast %17 : vector<1x128xf32> to vector<8x128xf32>
    %19 = arith.addf %16, %18 : vector<8x128xf32>
    %20 = math.tanh %19 : vector<8x128xf32>
    %21 = arith.truncf %20 : vector<8x128xf32> to vector<8x128xbf16>
    %c0_13 = arith.constant 0 : index
    %c0_14 = arith.constant 0 : index
    %22 = vector.load %arg6[%c0_13, %c0_14] : memref<128x16xbf16, #tpu.memory_space<vmem>>, vector<128x16xbf16>
    %cst_15 = arith.constant dense<0.000000e+00> : vector<8x16xf32>
    %23 = tpu.matmul %21, %22, %cst_15 {dimension_numbers = #tpu.dot_dimension_numbers<[1], [0], [0], [1], [0, 0, 1, 1], [], []>} : vector<8x128xbf16>, vector<128x16xbf16>, vector<8x16xf32> -> vector<8x16xf32>
    %c0_16 = arith.constant 0 : index
    %c0_17 = arith.constant 0 : index
    %24 = vector.load %arg7[%c0_16, %c0_17] : memref<1x16xf32, #tpu.memory_space<vmem>>, vector<1x16xf32>
    %25 = vector.broadcast %24 : vector<1x16xf32> to vector<8x16xf32>
    %26 = arith.addf %23, %25 : vector<8x16xf32>
    %c0_18 = arith.constant 0 : index
    %c0_19 = arith.constant 0 : index
    %27 = vector.load %arg8[%c0_18, %c0_19] : memref<8x16xf32, #tpu.memory_space<vmem>>, vector<8x16xf32>
    tpu.vector_store %arg8[%c0_18, %c0_19], %26 {strides = array<i32>} : memref<8x16xf32, #tpu.memory_space<vmem>>, vector<8x16xf32>,
    return
  }
  func.func @transform_0(%arg0: i32) -> (i32, i32) {
    %c0_i32 = arith.constant 0 : i32
    %c0_i32_0 = arith.constant 0 : i32
    return %arg0, %c0_i32 : i32, i32
  }
  func.func @transform_1(%arg0: i32) -> (i32, i32) {
    %c0_i32 = arith.constant 0 : i32
    %c0_i32_0 = arith.constant 0 : i32
    %c0_i32_1 = arith.constant 0 : i32
    return %c0_i32, %c0_i32_0 : i32, i32
  }
  func.func @transform_2(%arg0: i32) -> (i32, i32) {
    %c0_i32 = arith.constant 0 : i32
    %c0_i32_0 = arith.constant 0 : i32
    %c0_i32_1 = arith.constant 0 : i32
    return %c0_i32, %c0_i32_0 : i32, i32
  }
  func.func @transform_3(%arg0: i32) -> (i32, i32) {
    %c0_i32 = arith.constant 0 : i32
    %c0_i32_0 = arith.constant 0 : i32
    %c0_i32_1 = arith.constant 0 : i32
    return %c0_i32, %c0_i32_0 : i32, i32
  }
  func.func @transform_4(%arg0: i32) -> (i32, i32) {
    %c0_i32 = arith.constant 0 : i32
    %c0_i32_0 = arith.constant 0 : i32
    %c0_i32_1 = arith.constant 0 : i32
    return %c0_i32, %c0_i32_0 : i32, i32
  }
  func.func @transform_5(%arg0: i32) -> (i32, i32) {
    %c0_i32 = arith.constant 0 : i32
    %c0_i32_0 = arith.constant 0 : i32
    %c0_i32_1 = arith.constant 0 : i32
    return %c0_i32, %c0_i32_0 : i32, i32
  }
  func.func @transform_6(%arg0: i32) -> (i32, i32) {
    %c0_i32 = arith.constant 0 : i32
    %c0_i32_0 = arith.constant 0 : i32
    %c0_i32_1 = arith.constant 0 : i32
    return %c0_i32, %c0_i32_0 : i32, i32
  }
  func.func @transform_7(%arg0: i32) -> (i32, i32) {
    %c0_i32 = arith.constant 0 : i32
    %c0_i32_0 = arith.constant 0 : i32
    return %arg0, %c0_i32 : i32, i32
  }
}

</mosaic_0001>

<llo_original>
// kernel: tpu_custom_call.1
$region0: #{tpu_custom_call.1}
  #allocation0 [shape = 'u32[]', space=smem, size = 0x4, offset = 0x4, fixed_abs, tag = 'smem constant byte address 0x4 - core index']
  #allocation1 [shape = 'u32[144,128]{1,0:T(1,128)}', space=vmem, size = 0x12000, scoped, tag = 'internal scratch']
  %s0 = inlined_call_operand.vmem [shape: f32[8,32], index: 0, kind: input, shape index: {}]
  %s1 = inlined_call_operand.vmem [shape: bf16[32,64], index: 1, kind: input, shape index: {}]
  %s2 = inlined_call_operand.vmem [shape: f32[1,64], index: 2, kind: input, shape index: {}]
  %s3 = inlined_call_operand.vmem [shape: bf16[64,128], index: 3, kind: input, shape index: {}]
  %s4 = inlined_call_operand.vmem [shape: f32[1,128], index: 4, kind: input, shape index: {}]
  %s5 = inlined_call_operand.vmem [shape: bf16[128,16], index: 5, kind: input, shape index: {}]
  %s6 = inlined_call_operand.vmem [shape: f32[1,16], index: 6, kind: input, shape index: {}]
  %s7 = inlined_call_operand.hbm [shape: f32[8,16], index: 7, kind: output, shape index: {}]
  %s8 = sld [smem:[#allocation0]]
  $region38: #{tpu_custom_call.1} parent=0
    _
  %s10 = ssub.s32 1, %s8
  %s11 = scalar_select 0, %s10, %s8
  $region1: #{tpu_custom_call.1} parent=0
    #allocation2 [shape = 'u8[4096]{0}', space=vmem, size = 0x1000, scoped, tag = 'output window, operand 0, single buffered']
    #allocation3 [shape = 's32[1]{0}', space=sflag, size = 0x4, scoped, tag = 'scoped memory for tpu_custom_call.1']
    %12 = vsyncpa [#allocation3], 0
    // Predicated region
    $region2: #{tpu_custom_call.1} parent=1 // pred_check
      _
    $region3: #{tpu_custom_call.1} parent=1 // pred_check_branch
      %14 = sbr.rel (0) target = $region5
    $region4: #{tpu_custom_call.1} parent=1 // pred_region
      _
    $region5: #{tpu_custom_call.1} parent=1 // pred_fallthru
      _
    // Predicated region
    $region6: #{tpu_custom_call.1} parent=1 // pred_check
      _
    $region7: #{tpu_custom_call.1} parent=1 // pred_check_branch
      %16 = sbr.rel (0) target = $region9
    $region8: #{tpu_custom_call.1} parent=1 // pred_region
      _
    $region9: #{tpu_custom_call.1} parent=1 // pred_fallthru
      _
    // Predicated region
    $region10: #{tpu_custom_call.1} parent=1 // pred_check
      _
    $region11: #{tpu_custom_call.1} parent=1 // pred_check_branch
      %18 = sbr.rel (0) target = $region13
    $region12: #{tpu_custom_call.1} parent=1 // pred_region
      _
    $region13: #{tpu_custom_call.1} parent=1 // pred_fallthru
      _
    // Predicated region
    $region14: #{tpu_custom_call.1} parent=1 // pred_check
      _
    $region15: #{tpu_custom_call.1} parent=1 // pred_check_branch
      %20 = sbr.rel (0) target = $region17
    $region16: #{tpu_custom_call.1} parent=1 // pred_region
      _
    $region17: #{tpu_custom_call.1} parent=1 // pred_fallthru
      _
    // Predicated region
    $region18: #{tpu_custom_call.1} parent=1 // pred_check
      _
    $region19: #{tpu_custom_call.1} parent=1 // pred_check_branch
      %22 = sbr.rel (0) target = $region21
    $region20: #{tpu_custom_call.1} parent=1 // pred_region
      _
    $region21: #{tpu_custom_call.1} parent=1 // pred_fallthru
      _
    // Predicated region
    $region22: #{tpu_custom_call.1} parent=1 // pred_check
      _
    $region23: #{tpu_custom_call.1} parent=1 // pred_check_branch
      %24 = sbr.rel (0) target = $region25
    $region24: #{tpu_custom_call.1} parent=1 // pred_region
      _
    $region25: #{tpu_custom_call.1} parent=1 // pred_fallthru
      _
    // Predicated region
    $region26: #{tpu_custom_call.1} parent=1 // pred_check
      _
    $region27: #{tpu_custom_call.1} parent=1 // pred_check_branch
      %26 = sbr.rel (0) target = $region29
    $region28: #{tpu_custom_call.1} parent=1 // pred_region
      _
    $region29: #{tpu_custom_call.1} parent=1 // pred_fallthru
      _
    %v28 = vld [vmem:[%s0] sm:$0xff]
    %v29 = vpack.c.bf16 %v28, %v28
    %v30 = vld [vmem:[%s1] sm:$0xf]
    %v31 = vld [vmem:[%s1 + $0x4] sm:$0xf]
    %v32 = vld [vmem:[%s1 + $0x8] sm:$0xf]
    %v33 = vld [vmem:[%s1 + $0xc] sm:$0xf]
    %v34 = vld [vmem:[%s2] sm:$0x1]
    %v36 = vlaneseq
    %v37 = vshrl.u32 %v36, 7
    %v38 = vsub.s32 0, %v37
    %v39 = vrot.slane %v34, %v38
    %v45 = vunpack.c.l.b16 %v30
    %v46 = vunpack.c.l.b16 %v31
    %v47 = vunpack.c.l.b16 %v32
    %v48 = vunpack.c.l.b16 %v33
    %v49 = vpack.c.b16 %v46, %v45
    %v50 = vpack.c.b16 %v48, %v47
    %vm53 = vcmask 261120
    %v55 = vsel %vm53, %v29, 0
    %57 = vmatprep.subr.bf16.mxu0 0
    %58 = vmatpush1.bf16.msra.mxu0 %v49
    %59 = vmatprep.subr.bf16.mxu0 0
    %60 = vmatpush1.bf16.msra.mxu0 %v50
    %61 = vmatprep.subr.bf16.mxu0 0
    %62 = vmatpush1.bf16.msra.mxu0 0
    %63 = vmatprep.subr.bf16.mxu0 0
    %64 = vmatpush1.bf16.msra.mxu0 0
    %65 = vmatprep.subr.bf16.mxu0 0
    %66 = vmatpush1.bf16.msra.mxu0 0
    %67 = vmatprep.subr.bf16.mxu0 0
    %68 = vmatpush1.bf16.msra.mxu0 0
    %69 = vmatprep.subr.bf16.mxu0 0
    %70 = vmatpush1.bf16.msra.mxu0 0
    %71 = vmatprep.subr.bf16.mxu0 0
    %72 = vmatpush1.bf16.msra.mxu0 0
    %73 = vmatprep.subr.bf16.mxu0 0
    %74 = vmatpush1.bf16.msra.mxu0 0
    %75 = vmatprep.subr.bf16.mxu0 0
    %76 = vmatpush1.bf16.msra.mxu0 0
    %77 = vmatprep.subr.bf16.mxu0 0
    %78 = vmatpush1.bf16.msra.mxu0 0
    %79 = vmatprep.subr.bf16.mxu0 0
    %80 = vmatpush1.bf16.msra.mxu0 0
    %81 = vmatprep.subr.bf16.mxu0 0
    %82 = vmatpush1.bf16.msra.mxu0 0
    %83 = vmatprep.subr.bf16.mxu0 0
    %84 = vmatpush1.bf16.msra.mxu0 0
    %85 = vmatprep.subr.bf16.mxu0 0
    %86 = vmatpush1.bf16.msra.mxu0 0
    %87 = vmatprep.subr.bf16.mxu0 0
    %88 = vmatpush1.bf16.msra.mxu0 0
    %89 = vmatprep.mubr.bf16.mxu0 0
    %90 = vmatmul.mubr.bf16.gmra.mrb[0].mxu0 %v55
    %v91 = vpop.f32.mrb[0].mxu0
    %v92 = vadd.f32 %v39, %v91
    %v93 = vpop.f32.mrb[0].mxu0
    %v94 = vpop.f32.mrb[0].mxu0
    %v95 = vpop.f32.mrb[0].mxu0
    %96 = vdwg.mxu0
    %v97 = vmul.f32 %v92, 0.5
    %v98 = vtanh.pop %v97
    %v99 = vadd.f32 %v98, 1.0
    %v100 = vmul.f32 %v99, 0.5
    %v101 = vpack.c.bf16 %v100, %v100
    %v102 = vld [vmem:[%s3] sm:$0xf]
    %v103 = vld [vmem:[%s3 + $0x4] sm:$0xf]
    %v104 = vld [vmem:[%s3 + $0x8] sm:$0xf]
    %v105 = vld [vmem:[%s3 + $0xc] sm:$0xf]
    %v106 = vld [vmem:[%s3 + $0x10] sm:$0xf]
    %v107 = vld [vmem:[%s3 + $0x14] sm:$0xf]
    %v108 = vld [vmem:[%s3 + $0x18] sm:$0xf]
    %v109 = vld [vmem:[%s3 + $0x1c] sm:$0xf]
    %v110 = vld [vmem:[%s4] sm:$0x1]
    %v112 = vlaneseq
    %v113 = vshrl.u32 %v112, 7
    %v114 = vsub.s32 0, %v113
    %v115 = vrot.slane %v110, %v114
    %v125 = vunpack.c.l.b16 %v102
    %v126 = vunpack.c.l.b16 %v103
    %v127 = vunpack.c.l.b16 %v104
    %v128 = vunpack.c.l.b16 %v105
    %v129 = vunpack.c.l.b16 %v106
    %v130 = vunpack.c.l.b16 %v107
    %v131 = vunpack.c.l.b16 %v108
    %v132 = vunpack.c.l.b16 %v109
    %v133 = vpack.c.b16 %v126, %v125
    %v134 = vpack.c.b16 %v128, %v127
    %v135 = vpack.c.b16 %v130, %v129
    %v136 = vpack.c.b16 %v132, %v131
    %vm141 = vcmask 523264
    %v143 = vsel %vm141, %v101, 0
    %145 = vmatprep.subr.bf16.mxu0 0
    %146 = vmatpush1.bf16.msra.mxu0 %v133
    %147 = vmatprep.subr.bf16.mxu0 0
    %148 = vmatpush1.bf16.msra.mxu0 %v134
    %149 = vmatprep.subr.bf16.mxu0 0
    %150 = vmatpush1.bf16.msra.mxu0 %v135
    %151 = vmatprep.subr.bf16.mxu0 0
    %152 = vmatpush1.bf16.msra.mxu0 %v136
    %153 = vmatprep.subr.bf16.mxu0 0
    %154 = vmatpush1.bf16.msra.mxu0 0
    %155 = vmatprep.subr.bf16.mxu0 0
    %156 = vmatpush1.bf16.msra.mxu0 0
    %157 = vmatprep.subr.bf16.mxu0 0
    %158 = vmatpush1.bf16.msra.mxu0 0
    %159 = vmatprep.subr.bf16.mxu0 0
    %160 = vmatpush1.bf16.msra.mxu0 0
    %161 = vmatprep.subr.bf16.mxu0 0
    %162 = vmatpush1.bf16.msra.mxu0 0
    %163 = vmatprep.subr.bf16.mxu0 0
    %164 = vmatpush1.bf16.msra.mxu0 0
    %165 = vmatprep.subr.bf16.mxu0 0
    %166 = vmatpush1.bf16.msra.mxu0 0
    %167 = vmatprep.subr.bf16.mxu0 0
    %168 = vmatpush1.bf16.msra.mxu0 0
    %169 = vmatprep.subr.bf16.mxu0 0
    %170 = vmatpush1.bf16.msra.mxu0 0
    %171 = vmatprep.subr.bf16.mxu0 0
    %172 = vmatpush1.bf16.msra.mxu0 0
    %173 = vmatprep.subr.bf16.mxu0 0
    %174 = vmatpush1.bf16.msra.mxu0 0
    %175 = vmatprep.subr.bf16.mxu0 0
    %176 = vmatpush1.bf16.msra.mxu0 0
    %177 = vmatprep.mubr.bf16.mxu0 0
    %178 = vmatmul.mubr.bf16.gmra.mrb[0].mxu0 %v143
    %v179 = vpop.f32.mrb[0].mxu0
    %v180 = vadd.f32 %v115, %v179
    %v181 = vpop.f32.mrb[0].mxu0
    %v182 = vpop.f32.mrb[0].mxu0
    %v183 = vpop.f32.mrb[0].mxu0
    %184 = vdwg.mxu0
    %v185 = vtanh.pop %v180
    %v186 = vpack.c.bf16 %v185, %v185
    %v187 = vld [vmem:[%s5] sm:$0xf]
    %v188 = vld [vmem:[%s5 + $0x4] sm:$0xf]
    %v189 = vld [vmem:[%s5 + $0x8] sm:$0xf]
    %v190 = vld [vmem:[%s5 + $0xc] sm:$0xf]
    %v191 = vld [vmem:[%s5 + $0x10] sm:$0xf]
    %v192 = vld [vmem:[%s5 + $0x14] sm:$0xf]
    %v193 = vld [vmem:[%s5 + $0x18] sm:$0xf]
    %v194 = vld [vmem:[%s5 + $0x1c] sm:$0xf]
    %v195 = vld [vmem:[%s5 + $0x20] sm:$0xf]
    %v196 = vld [vmem:[%s5 + $0x24] sm:$0xf]
    %v197 = vld [vmem:[%s5 + $0x28] sm:$0xf]
    %v198 = vld [vmem:[%s5 + $0x2c] sm:$0xf]
    %v199 = vld [vmem:[%s5 + $0x30] sm:$0xf]
    %v200 = vld [vmem:[%s5 + $0x34] sm:$0xf]
    %v201 = vld [vmem:[%s5 + $0x38] sm:$0xf]
    %v202 = vld [vmem:[%s5 + $0x3c] sm:$0xf]
    %v203 = vld [vmem:[%s6] sm:$0x1]
    %v205 = vlaneseq
    %v206 = vshrl.u32 %v205, 7
    %v207 = vsub.s32 0, %v206
    %v208 = vrot.slane %v203, %v207
    %v226 = vunpack.c.l.b16 %v187
    %v227 = vunpack.c.l.b16 %v188
    %v228 = vunpack.c.l.b16 %v189
    %v229 = vunpack.c.l.b16 %v190
    %v230 = vunpack.c.l.b16 %v191
    %v231 = vunpack.c.l.b16 %v192
    %v232 = vunpack.c.l.b16 %v193
    %v233 = vunpack.c.l.b16 %v194
    %v234 = vunpack.c.l.b16 %v195
    %v235 = vunpack.c.l.b16 %v196
    %v236 = vunpack.c.l.b16 %v197
    %v237 = vunpack.c.l.b16 %v198
    %v238 = vunpack.c.l.b16 %v199
    %v239 = vunpack.c.l.b16 %v200
    %v240 = vunpack.c.l.b16 %v201
    %v241 = vunpack.c.l.b16 %v202
    %v242 = vpack.c.b16 %v227, %v226
    %v243 = vpack.c.b16 %v229, %v228
    %v244 = vpack.c.b16 %v231, %v230
    %v245 = vpack.c.b16 %v233, %v232
    %v246 = vpack.c.b16 %v235, %v234
    %v247 = vpack.c.b16 %v237, %v236
    %v248 = vpack.c.b16 %v239, %v238
    %v249 = vpack.c.b16 %v241, %v240
    %258 = vmatprep.subr.bf16.mxu0 0
    %259 = vmatpush1.bf16.msra.mxu0 %v242
    %260 = vmatprep.subr.bf16.mxu0 0
    %261 = vmatpush1.bf16.msra.mxu0 %v243
    %262 = vmatprep.subr.bf16.mxu0 0
    %263 = vmatpush1.bf16.msra.mxu0 %v244
    %264 = vmatprep.subr.bf16.mxu0 0
    %265 = vmatpush1.bf16.msra.mxu0 %v245
    %266 = vmatprep.subr.bf16.mxu0 0
    %267 = vmatpush1.bf16.msra.mxu0 %v246
    %268 = vmatprep.subr.bf16.mxu0 0
    %269 = vmatpush1.bf16.msra.mxu0 %v247
    %270 = vmatprep.subr.bf16.mxu0 0
    %271 = vmatpush1.bf16.msra.mxu0 %v248
    %272 = vmatprep.subr.bf16.mxu0 0
    %273 = vmatpush1.bf16.msra.mxu0 %v249
    %274 = vmatprep.subr.bf16.mxu0 0
    %275 = vmatpush1.bf16.msra.mxu0 0
    %276 = vmatprep.subr.bf16.mxu0 0
    %277 = vmatpush1.bf16.msra.mxu0 0
    %278 = vmatprep.subr.bf16.mxu0 0
    %279 = vmatpush1.bf16.msra.mxu0 0
    %280 = vmatprep.subr.bf16.mxu0 0
    %281 = vmatpush1.bf16.msra.mxu0 0
    %282 = vmatprep.subr.bf16.mxu0 0
    %283 = vmatpush1.bf16.msra.mxu0 0
    %284 = vmatprep.subr.bf16.mxu0 0
    %285 = vmatpush1.bf16.msra.mxu0 0
    %286 = vmatprep.subr.bf16.mxu0 0
    %287 = vmatpush1.bf16.msra.mxu0 0
    %288 = vmatprep.subr.bf16.mxu0 0
    %289 = vmatpush1.bf16.msra.mxu0 0
    %290 = vmatprep.mubr.bf16.mxu0 0
    %291 = vmatmul.mubr.bf16.gmra.mrb[0].mxu0 %v186
    %v292 = vpop.f32.mrb[0].mxu0
    %v293 = vadd.f32 %v208, %v292
    %v294 = vpop.f32.mrb[0].mxu0
    %v295 = vpop.f32.mrb[0].mxu0
    %v296 = vpop.f32.mrb[0].mxu0
    %297 = vdwg.mxu0
    %vm298 = vcmask 130048
    %299 = vst.msk [vmem:[#allocation2] sm:$0xff] %vm298, %v293
    // Predicated region
    $region30: #{tpu_custom_call.1} parent=1 // pred_check
      _
    $region31: #{tpu_custom_call.1} parent=1 // pred_check_branch
      %301 = sbr.rel (0) target = $region33
    $region32: #{tpu_custom_call.1} parent=1 // pred_region
      %s303 = ssub.s32 128, 128
      %304 = vsyncadd [#allocation3], %s303
      %s306 = sshll.u32 [#allocation2], 4
      %s307 = int_to_ptr.vmem [resolvable:$true] %s306
      %309 = dma.vmem_to_hbm [thread:$0]  %s307, 128, %s7, [#allocation3]
    $region33: #{tpu_custom_call.1} parent=1 // pred_fallthru
      _
    // Predicated region
    $region34: #{tpu_custom_call.1} parent=1 // pred_check
      _
    $region35: #{tpu_custom_call.1} parent=1 // pred_check_branch
      %311 = sbr.rel (0) target = $region37
    $region36: #{tpu_custom_call.1} parent=1 // pred_region
      %312 = dma.done [#allocation3], 128
    $region37: #{tpu_custom_call.1} parent=1 // pred_fallthru
      _
    %313 = vsyncpa [#allocation3], 1

</llo_original>
